<compile_context>
chip_gen: v7x
topology: tpu7x:2x2x1
jax: 0.10.0
libtpu: 0.0.40
codegen_flags: <defaults>
</compile_context>

<pallas_src>
import jax
import jax.numpy as jnp
from jax.experimental import pallas as pl
from jax.experimental.pallas import tpu as pltpu

_LANES = 128
_MAX_TILE_B = 2048
_MAX_STREAM_F = 4096            # stream full F in one block up to this width
_DEFAULT_TILE_F = 2048          # lane tile when F is tiled (multiple of 128)
_MIN_PIPELINE_BYTES = 2 * 1024 * 1024


def _round_up(x, m):
    return ((x + m - 1) // m) * m


def _sublane_multiple(dtype):
    # Packed sublane multiple: 8 for 4-byte, 16 for 2-byte, 32 for 1-byte dtypes.
    return {4: 8, 2: 16, 1: 32}.get(jnp.dtype(dtype).itemsize, 8)


def _vmem_budget():
    """(per-buffer tile byte budget, vmem_limit_bytes), sized per chip VMEM."""
    cap = 64 * 1024 * 1024
    try:
        cap = int(pltpu.get_tpu_info().vmem_capacity_bytes)
    except Exception:
        pass
    if cap >= 128 * 1024 * 1024:                 # v5e / v6e: 128 MiB physical
        return 16 * 1024 * 1024, 64 * 1024 * 1024
    return 8 * 1024 * 1024, 32 * 1024 * 1024     # v7x (64 MiB) / unknown


def _pick_tile_b(B, row_bytes, sub, tile_budget, block_b, total_bytes):
    """Batch tile size: budget-limited, sublane-aligned, >=4 tiles when big."""
    if block_b is not None:
        tb = max(1, min(int(block_b), B))
        if tb >= B:
            return B
        return min(_round_up(tb, sub), B)
    rows_budget = max(sub, tile_budget // max(1, row_bytes))
    tb = min(rows_budget, _MAX_TILE_B, B)
    # Keep >= 4 pipelined batch tiles once the input is big enough to care
    # (DMA/compute overlap; lets v7x split the batch across its 2 TCs).
    if total_bytes >= _MIN_PIPELINE_BYTES and B >= 4 * sub:
        tb = min(tb, max(sub, B // 4))
    if tb >= B:
        return B
    return max(sub, (tb // sub) * sub)


def _chunked_row_accumulate(x_ref, acc, n_chunks, valid_cols=None):
    """acc += 128-lane chunks of x_ref widened to f32 (VPU adds only).

    acc: (tile_b, 128) f32 value.  valid_cols (static Python int) masks local
    columns >= valid_cols (ragged last feature tile).  Returns updated acc.
    """
    for c in range(n_chunks):
        lo = c * _LANES
        if valid_cols is not None and lo >= valid_cols:
            break  # fully out-of-range chunks contribute nothing
        chunk = x_ref[:, pl.ds(lo, _LANES)].astype(jnp.float32)
        if valid_cols is not None and lo + _LANES > valid_cols:
            col = lo + jax.lax.broadcasted_iota(jnp.int32, chunk.shape, 1)
            chunk = jnp.where(col < valid_cols, chunk, jnp.float32(0.0))
        acc = acc + chunk
    return acc


def _make_stream_kernel(F):
    """Full-F-per-block kernel: (tile_b, F) -> (tile_b, 1) float32 row sums."""
    n_chunks = F // _LANES
    rem = F - n_chunks * _LANES

    def kernel(x_ref, o_ref):
        if n_chunks == 0:
            # Tiny F: a single whole-tile reduce is cheapest.
            o_ref[...] = jnp.sum(x_ref[...].astype(jnp.float32), axis=1,
                                 keepdims=True)
            return
        acc = jnp.zeros((x_ref.shape[0], _LANES), jnp.float32)
        acc = _chunked_row_accumulate(x_ref, acc, n_chunks)
        total = jnp.sum(acc, axis=1, keepdims=True)     # one XLU reduce / tile
        if rem:
            tail = x_ref[:, pl.ds(n_chunks * _LANES, rem)].astype(jnp.float32)
            total = total + jnp.sum(tail, axis=1, keepdims=True)
        o_ref[...] = total

    return kernel


def _make_acc_kernel(F, tile_f):
    """F-tiled kernel: accumulate (tile_b, 128) partials across the k axis."""
    n_chunks = tile_f // _LANES
    last_valid = F % tile_f        # 0 => last feature tile is full (no mask)

    def kernel(x_ref, o_ref, part_ref):
        k = pl.program_id(1)
        nk = pl.num_programs(1)

        @pl.when(k == 0)
        def _init():
            part_ref[...] = jnp.zeros_like(part_ref)

        if last_valid == 0:
            part_ref[...] = _chunked_row_accumulate(x_ref, part_ref[...],
                                                    n_chunks)
        else:
            @pl.when(k < nk - 1)
            def _full_tiles():
                part_ref[...] = _chunked_row_accumulate(x_ref, part_ref[...],
                                                        n_chunks)

            @pl.when(k == nk - 1)
            def _ragged_last_tile():
                part_ref[...] = _chunked_row_accumulate(
                    x_ref, part_ref[...], n_chunks, valid_cols=last_valid)

        @pl.when(k == nk - 1)
        def _finalize():
            # Single cross-lane reduce per batch tile, straight into o_ref.
            o_ref[...] = jnp.sum(part_ref[...], axis=1, keepdims=True)

    return kernel


def sum_feature_encoder(binary_feature, *, block_b=None, block_f=None):
    """Pallas equivalent of SumFeatureEncoder.forward: (B, F) -> (B, 1) f32."""
    if binary_feature.ndim != 2:
        raise ValueError(f"expected (batch, features), got {binary_feature.shape}")
    if binary_feature.dtype == jnp.bool_:
        # Mosaic i1 layouts are awkward; int8 keeps HBM traffic identical.
        binary_feature = binary_feature.astype(jnp.int8)

    B, F = binary_feature.shape
    itemsize = jnp.dtype(binary_feature.dtype).itemsize
    sub = _sublane_multiple(binary_feature.dtype)
    tile_budget, vmem_limit = _vmem_budget()
    total_bytes = B * F * itemsize
    out_shape = jax.ShapeDtypeStruct((B, 1), jnp.float32)
    cost = pl.CostEstimate(flops=B * F, transcendentals=0,
                           bytes_accessed=total_bytes + B * 4)

    use_f_tiling = (F > _LANES) and (block_f is not None or F > _MAX_STREAM_F)

    if not use_f_tiling:
        # --- Streaming path: one block covers all of F, tile the batch. ---
        tile_b = _pick_tile_b(B, F * itemsize, sub, tile_budget, block_b,
                              total_bytes)
        grid = (pl.cdiv(B, tile_b),)
        return pl.pallas_call(
            _make_stream_kernel(F),
            out_shape=out_shape,
            grid_spec=pltpu.PrefetchScalarGridSpec(
                num_scalar_prefetch=0,
                grid=grid,
                in_specs=[pl.BlockSpec((tile_b, F), lambda i: (i, 0))],
                out_specs=pl.BlockSpec((tile_b, 1), lambda i: (i, 0)),
            ),
            compiler_params=pltpu.CompilerParams(
                dimension_semantics=("parallel",),
                vmem_limit_bytes=vmem_limit,
            ),
            cost_estimate=cost,
        )(binary_feature)

    # --- Large-F path: tile the feature axis; mask the ragged last tile. ---
    if block_f is not None:
        tile_f = max(_LANES, (int(block_f) // _LANES) * _LANES)
    else:
        tile_f = _DEFAULT_TILE_F
    # Never wider than the largest lane-aligned width that fits inside F.
    tile_f = min(tile_f, max(_LANES, (F // _LANES) * _LANES))

    tile_b = _pick_tile_b(B, tile_f * itemsize, sub, tile_budget, block_b,
                          total_bytes)
    grid = (pl.cdiv(B, tile_b), pl.cdiv(F, tile_f))
    return pl.pallas_call(
        _make_acc_kernel(F, tile_f),
        out_shape=out_shape,
        grid_spec=pltpu.PrefetchScalarGridSpec(
            num_scalar_prefetch=0,
            grid=grid,
            in_specs=[pl.BlockSpec((tile_b, tile_f), lambda i, k: (i, k))],
            out_specs=pl.BlockSpec((tile_b, 1), lambda i, k: (i, 0)),
            scratch_shapes=[pltpu.VMEM((tile_b, _LANES), jnp.float32)],
        ),
        compiler_params=pltpu.CompilerParams(
            dimension_semantics=("parallel", "arbitrary"),
            vmem_limit_bytes=vmem_limit,
        ),
        cost_estimate=cost,
    )(binary_feature)


if __name__ == "__main__":
    key = jax.random.PRNGKey(0)
    k1, k2, k3, k4, k5 = jax.random.split(key, 5)

    # Case 1: module-sized demo — batch=2, binary_input_size=16, int8 0/1 input.
    x1 = jax.random.bernoulli(k1, p=0.5, shape=(2, 16)).astype(jnp.int8)
    o1 = jax.block_until_ready(sum_feature_encoder(x1))
    r1 = jnp.sum(x1.astype(jnp.float32), axis=1, keepdims=True)
    assert o1.shape == (2, 1), o1.shape
    assert o1.dtype == jnp.float32, o1.dtype
    assert jnp.allclose(o1, r1), (o1, r1)

    # Case 2: streaming path, ragged batch edge + ragged lane remainder (F=300).
    x2 = jax.random.normal(k2, (20, 300), dtype=jnp.float32)
    o2 = jax.block_until_ready(sum_feature_encoder(x2, block_b=8))
    r2 = jnp.sum(x2, axis=1, keepdims=True)
    assert o2.shape == (20, 1) and o2.dtype == jnp.float32
    assert jnp.allclose(o2, r2, rtol=1e-5, atol=1e-3)

    # Case 3: F-tiled accumulator path with in-kernel mask of the ragged
    # last feature tile (300 -> 3 tiles of 128, last tile has 44 valid cols).
    x3 = jax.random.normal(k3, (16, 300), dtype=jnp.float32)
    o3 = jax.block_until_ready(sum_feature_encoder(x3, block_b=8, block_f=128))
    r3 = jnp.sum(x3, axis=1, keepdims=True)
    assert o3.shape == (16, 1) and o3.dtype == jnp.float32
    assert jnp.allclose(o3, r3, rtol=1e-5, atol=1e-3)

    # Case 4: automatic F tiling (F > 4096), masked 904-column last tile.
    x4 = jax.random.normal(k4, (8, 5000), dtype=jnp.float32)
    o4 = jax.block_until_ready(sum_feature_encoder(x4))
    r4 = jnp.sum(x4, axis=1, keepdims=True)
    assert o4.shape == (8, 1) and jnp.allclose(o4, r4, rtol=1e-5, atol=1e-3)

    # Case 5: medium input -> >= 4 pipelined batch tiles on the streaming path.
    x5 = jax.random.normal(k5, (512, 1024), dtype=jnp.float32)
    o5 = jax.block_until_ready(sum_feature_encoder(x5))
    r5 = jnp.sum(x5, axis=1, keepdims=True)
    assert o5.shape == (512, 1) and jnp.allclose(o5, r5, rtol=1e-5, atol=1e-3)

    print("KERNEL_OK")
</pallas_src>

<mosaic_0001>
module attributes {stable_mosaic.version = 11 : i64} {
  func.func @kernel(%arg0: i32, %arg1: memref<2x16xi8, #tpu.memory_space<vmem>>, %arg2: memref<2x1xf32, #tpu.memory_space<vmem>>) attributes {dimension_semantics = [#tpu.dimension_semantics<parallel>], iteration_bounds = array<i64: 1>, scalar_prefetch = 0 : i64, scratch_operands = 0 : i64, tpu.core_type = #tpu.core_type<tc>, window_params = [{transform_indices = @transform_0, window_bounds = array<i64: 2, 16>}, {transform_indices = @transform_1, window_bounds = array<i64: 2, 1>}]} {
    %c0 = arith.constant 0 : index
    %c0_0 = arith.constant 0 : index
    %0 = vector.load %arg1[%c0, %c0_0] : memref<2x16xi8, #tpu.memory_space<vmem>>, vector<2x16xi8>
    %1 = arith.sitofp %0 : vector<2x16xi8> to vector<2x16xf32>
    %cst = arith.constant dense<0.000000e+00> : vector<2xf32>
    %2 = vector.multi_reduction <add>, %1, %cst [1] : vector<2x16xf32> to vector<2xf32>
    %3 = vector.shape_cast %2 : vector<2xf32> to vector<2x1xf32>
    %c0_1 = arith.constant 0 : index
    %c0_2 = arith.constant 0 : index
    %4 = vector.load %arg2[%c0_1, %c0_2] : memref<2x1xf32, #tpu.memory_space<vmem>>, vector<2x1xf32>
    tpu.vector_store %arg2[%c0_1, %c0_2], %3 {strides = array<i32>} : memref<2x1xf32, #tpu.memory_space<vmem>>, vector<2x1xf32>,
    return
  }
  func.func @transform_0(%arg0: i32) -> (i32, i32) {
    %c0_i32 = arith.constant 0 : i32
    %c0_i32_0 = arith.constant 0 : i32
    return %arg0, %c0_i32 : i32, i32
  }
  func.func @transform_1(%arg0: i32) -> (i32, i32) {
    %c0_i32 = arith.constant 0 : i32
    %c0_i32_0 = arith.constant 0 : i32
    return %arg0, %c0_i32 : i32, i32
  }
}

</mosaic_0001>

<llo_original>
// kernel: tpu_custom_call.1
$region0: #{tpu_custom_call.1}
  #allocation0 [shape = 'u32[]', space=smem, size = 0x4, offset = 0x4, fixed_abs, tag = 'smem constant byte address 0x4 - core index']
  #allocation1 [shape = 'u32[144,128]{1,0:T(1,128)}', space=vmem, size = 0x12000, scoped, tag = 'internal scratch']
  %s0 = inlined_call_operand.hbm [shape: s8[2,16], index: 0, kind: input, shape index: {}]
  %s1 = inlined_call_operand.vmem [shape: f32[2,1], index: 1, kind: output, shape index: {}]
  %s2 = sld [smem:[#allocation0]]
  $region18: #{tpu_custom_call.1} parent=0
    _
  %s4 = ssub.s32 1, %s2
  %s5 = scalar_select 0, %s4, %s2
  $region1: #{tpu_custom_call.1} parent=0
    #allocation2 [shape = 'u8[512]{0}', space=vmem, size = 0x400, scoped, tag = 'input window, operand 0, single buffered']
    #allocation3 [shape = 's32[1]{0}', space=sflag, size = 0x4, scoped, tag = 'scoped memory for tpu_custom_call.1']
    %6 = vsyncpa [#allocation3], 0
    // Predicated region
    $region2: #{tpu_custom_call.1} parent=1 // pred_check
      _
    $region3: #{tpu_custom_call.1} parent=1 // pred_check_branch
      %8 = sbr.rel (0) target = $region5
    $region4: #{tpu_custom_call.1} parent=1 // pred_region
      %s10 = ssub.s32 16, 16
      %11 = vsyncadd [#allocation3], %s10
      %s13 = sshll.u32 [#allocation2], 4
      %s14 = int_to_ptr.vmem [resolvable:$true] %s13
      %16 = dma.hbm_to_vmem [thread:$0]  %s0, 16, %s14, [#allocation3]
    $region5: #{tpu_custom_call.1} parent=1 // pred_fallthru
      _
    // Predicated region
    $region6: #{tpu_custom_call.1} parent=1 // pred_check
      _
    $region7: #{tpu_custom_call.1} parent=1 // pred_check_branch
      %18 = sbr.rel (0) target = $region9
    $region8: #{tpu_custom_call.1} parent=1 // pred_region
      %19 = dma.done [#allocation3], 16
    $region9: #{tpu_custom_call.1} parent=1 // pred_fallthru
      _
    %v20 = vld [vmem:[#allocation2] sm:$0x1]
    %v21 = vunpack.c.0.s8 %v20
    %v22 = vcvt.s32.f32 %v21
    %vm23 = vcmask 123904
    %v24 = vsel %vm23, %v22, 0.0
    %25 = vadd.xlane.f32.xlu0 %v24
    %v26 = vpop.xlane.xlu0 %25
    %vm27 = vcmask 1024
    %28 = vst.msk [vmem:[%s1] sm:$0x3] %vm27, %v26
    // Predicated region
    $region10: #{tpu_custom_call.1} parent=1 // pred_check
      _
    $region11: #{tpu_custom_call.1} parent=1 // pred_check_branch
      %30 = sbr.rel (0) target = $region13
    $region12: #{tpu_custom_call.1} parent=1 // pred_region
      _
    $region13: #{tpu_custom_call.1} parent=1 // pred_fallthru
      _
    // Predicated region
    $region14: #{tpu_custom_call.1} parent=1 // pred_check
      _
    $region15: #{tpu_custom_call.1} parent=1 // pred_check_branch
      %32 = sbr.rel (0) target = $region17
    $region16: #{tpu_custom_call.1} parent=1 // pred_region
      _
    $region17: #{tpu_custom_call.1} parent=1 // pred_fallthru
      _
    %33 = vsyncpa [#allocation3], 1

</llo_original>
